<compile_context>
chip_gen: v5e
topology: v5e:2x2
jax: 0.10.0
libtpu: 0.0.40
codegen_flags: <defaults>
</compile_context>

<pallas_src>
import functools

import jax
import jax.numpy as jnp
from jax.experimental import pallas as pl
from jax.experimental.pallas import tpu as pltpu


# ----------------------------------------------------------------------------
# Kernels.  x_ref is the (1, 1) parameter (VMEM, resident across the grid).
# ----------------------------------------------------------------------------
def _row_kernel(x_ref, o_ref):
    # val = 100 * (sigmoid(x)/1000 + 1), shape (1, 1): EUP logistic + VPU fma.
    val = (jax.nn.sigmoid(x_ref[...]) * jnp.float32(1e-3) + jnp.float32(1.0)) * jnp.float32(100.0)
    lane = jax.lax.broadcasted_iota(jnp.int32, o_ref.shape, dimension=1)
    o_ref[...] = jnp.where(lane == 0, val, jnp.float32(0.0))


def _packed_kernel(x_ref, o_ref, *, out_dim):
    # Lane-dense layout: o_ref is a (TILE_R, 128) slab of the row-major
    # flattened (B, outDim) output.  Since out_dim divides 128, column 0 of
    # the original array corresponds to lane % out_dim == 0 (power-of-two mod
    # -> bitwise AND on the VPU), independent of the block offset.
    val = (jax.nn.sigmoid(x_ref[...]) * jnp.float32(1e-3) + jnp.float32(1.0)) * jnp.float32(100.0)
    lane = jax.lax.broadcasted_iota(jnp.int32, o_ref.shape, dimension=1)
    o_ref[...] = jnp.where((lane % out_dim) == 0, val, jnp.float32(0.0))


# ----------------------------------------------------------------------------
# Wrapper.
# ----------------------------------------------------------------------------
class PolicyNetVeryBadPallas:
    """Pallas port of PolicyNetVeryBad ('confidently predicts class one always')."""

    _TARGET_BLOCK_BYTES = 2 << 20  # ~2 MiB per output block (~4 MiB double-buffered)

    def __init__(self, out_dim: int):
        self.outDim = int(out_dim)
        # nn.Parameter(torch.ones(1, 1)) -- kept on device.
        self.x = jnp.ones((1, 1), jnp.float32)
        # Cache of jitted callables keyed by batch size.
        self._fwd_cache = {}

    # --- build a jitted forward for one batch size -------------------------
    def _build_forward(self, batch: int):
        out_dim = self.outDim
        n_elems = batch * out_dim

        param_spec = pl.BlockSpec((1, 1), lambda i: (0, 0))
        compiler_params = pltpu.CompilerParams(dimension_semantics=("parallel",))
        cost = pl.CostEstimate(flops=0, transcendentals=1, bytes_accessed=n_elems * 4)

        # Lane-dense packed path when the flattened output retiles into full
        # 128-lane rows and outDim divides 128 (i.e. outDim is a power of two).
        use_packed = (
            0 < out_dim <= 128
            and (out_dim & (out_dim - 1)) == 0
            and n_elems % 128 == 0
        )

        if use_packed:
            rows = n_elems // 128
            tile_r = min(rows, max(8, self._TARGET_BLOCK_BYTES // (128 * 4)))
            if tile_r < rows:
                tile_r = max(8, (tile_r // 8) * 8)  # sublane-aligned partial tiles
            call = pl.pallas_call(
                functools.partial(_packed_kernel, out_dim=out_dim),
                grid=(pl.cdiv(rows, tile_r),),
                in_specs=[param_spec],
                out_specs=pl.BlockSpec((tile_r, 128), lambda i: (i, 0)),
                out_shape=jax.ShapeDtypeStruct((rows, 128), jnp.float32),
                compiler_params=compiler_params,
                cost_estimate=cost,
            )

            def fwd(x):
                return call(x).reshape(batch, out_dim)

        else:
            tile_b = min(batch, max(8, self._TARGET_BLOCK_BYTES // max(1, out_dim * 4)))
            if tile_b < batch:
                tile_b = max(8, (tile_b // 8) * 8)
            call = pl.pallas_call(
                _row_kernel,
                grid=(pl.cdiv(batch, tile_b),),
                in_specs=[param_spec],
                out_specs=pl.BlockSpec((tile_b, out_dim), lambda i: (i, 0)),
                out_shape=jax.ShapeDtypeStruct((batch, out_dim), jnp.float32),
                compiler_params=compiler_params,
                cost_estimate=cost,
            )

            def fwd(x):
                return call(x)

        return jax.jit(fwd)

    # --- public forward -----------------------------------------------------
    def forward(self, states):
        # Only states.shape[0] matters; the state values never reach the kernel.
        batch = states.shape[0]
        fwd = self._fwd_cache.get(batch)
        if fwd is None:
            fwd = self._build_forward(batch)
            self._fwd_cache[batch] = fwd
        return fwd(self.x)


# ----------------------------------------------------------------------------
# Self-test.
# ----------------------------------------------------------------------------
if __name__ == "__main__":
    key = jax.random.PRNGKey(0)

    def reference(net, n_rows):
        stupid_one = jax.nn.sigmoid(net.x) / 1000.0 + 1.0
        out = jnp.zeros((n_rows, net.outDim), jnp.float32).at[:, 0].set(100.0)
        return out * stupid_one

    ok = True

    # Case 1: small batch (row-layout fallback path).  batch=2, inDim=16, outDim=8.
    B, IN_DIM, OUT_DIM = 2, 16, 8
    states = jax.random.normal(key, (B, IN_DIM), dtype=jnp.float32)
    net = PolicyNetVeryBadPallas(OUT_DIM)

    out = jax.block_until_ready(net.forward(states))
    out2 = jax.block_until_ready(net.forward(states))  # cached dispatch
    exp = reference(net, B)
    ok = ok and out.shape == (B, OUT_DIM) and out.dtype == jnp.float32
    ok = ok and bool(jnp.allclose(out, exp, atol=1e-6, rtol=1e-6))
    ok = ok and bool(jnp.allclose(out2, exp, atol=1e-6, rtol=1e-6))

    # Case 2: batch=256 so batch*outDim = 2048 = 16*128 -> lane-dense packed path.
    B2 = 256
    states2 = jax.random.normal(key, (B2, IN_DIM), dtype=jnp.float32)
    out3 = jax.block_until_ready(net.forward(states2))
    exp3 = reference(net, B2)
    ok = ok and out3.shape == (B2, OUT_DIM) and out3.dtype == jnp.float32
    ok = ok and bool(jnp.allclose(out3, exp3, atol=1e-6, rtol=1e-6))

    print("KERNEL_OK" if ok else "KERNEL_MISMATCH")
</pallas_src>

<mosaic_0001>
module attributes {stable_mosaic.version = 11 : i64} {
  func.func @_row_kernel(%arg0: i32, %arg1: memref<1x1xf32, #tpu.memory_space<vmem>>, %arg2: memref<2x8xf32, #tpu.memory_space<vmem>>) attributes {dimension_semantics = [#tpu.dimension_semantics<parallel>], iteration_bounds = array<i64: 1>, scalar_prefetch = 0 : i64, scratch_operands = 0 : i64, tpu.core_type = #tpu.core_type<tc>, window_params = [{pipeline_mode = #tpu.pipeline_mode<synchronous>, transform_indices = @transform_0, window_bounds = array<i64: 1, 1>}, {transform_indices = @transform_1, window_bounds = array<i64: 2, 8>}]} {
    %c0 = arith.constant 0 : index
    %c0_0 = arith.constant 0 : index
    %0 = vector.load %arg1[%c0, %c0_0] : memref<1x1xf32, #tpu.memory_space<vmem>>, vector<1x1xf32>
    %1 = arith.negf %0 : vector<1x1xf32>
    %2 = math.exp %1 : vector<1x1xf32>
    %cst = arith.constant 1.000000e+00 : f32
    %3 = vector.broadcast %cst : f32 to vector<1x1xf32>
    %4 = arith.addf %3, %2 : vector<1x1xf32>
    %5 = arith.divf %3, %4 : vector<1x1xf32>
    %cst_1 = arith.constant 1.000000e-03 : f32
    %6 = vector.broadcast %cst_1 : f32 to vector<1x1xf32>
    %7 = arith.mulf %5, %6 : vector<1x1xf32>
    %cst_2 = arith.constant 1.000000e+00 : f32
    %8 = vector.broadcast %cst_2 : f32 to vector<1x1xf32>
    %9 = arith.addf %7, %8 : vector<1x1xf32>
    %cst_3 = arith.constant 1.000000e+02 : f32
    %10 = vector.broadcast %cst_3 : f32 to vector<1x1xf32>
    %11 = arith.mulf %9, %10 : vector<1x1xf32>
    %12 = tpu.iota {dimensions = array<i32: 1>} : vector<2x8xi32>
    %c0_i32 = arith.constant 0 : i32
    %13 = vector.broadcast %c0_i32 : i32 to vector<2x8xi32>
    %14 = arith.cmpi eq, %12, %13 : vector<2x8xi32>
    %cst_4 = arith.constant 0.000000e+00 : f32
    %15 = vector.shape_cast %11 : vector<1x1xf32> to vector<1x1xf32>
    %16 = vector.broadcast %15 : vector<1x1xf32> to vector<2x8xf32>
    %17 = vector.broadcast %cst_4 : f32 to vector<2x8xf32>
    %18 = arith.select %14, %16, %17 : vector<2x8xi1>, vector<2x8xf32>
    %c0_5 = arith.constant 0 : index
    %c0_6 = arith.constant 0 : index
    %19 = vector.load %arg2[%c0_5, %c0_6] : memref<2x8xf32, #tpu.memory_space<vmem>>, vector<2x8xf32>
    tpu.vector_store %arg2[%c0_5, %c0_6], %18 {strides = array<i32>} : memref<2x8xf32, #tpu.memory_space<vmem>>, vector<2x8xf32>,
    return
  }
  func.func @transform_0(%arg0: i32) -> (i32, i32) {
    %c0_i32 = arith.constant 0 : i32
    %c0_i32_0 = arith.constant 0 : i32
    %c0_i32_1 = arith.constant 0 : i32
    return %c0_i32, %c0_i32_0 : i32, i32
  }
  func.func @transform_1(%arg0: i32) -> (i32, i32) {
    %c0_i32 = arith.constant 0 : i32
    %c0_i32_0 = arith.constant 0 : i32
    return %arg0, %c0_i32 : i32, i32
  }
}

</mosaic_0001>

<llo_original>
// kernel: fwd.1
$region0: #{fwd.1}
  #allocation0 [shape = 'u32[]', space=smem, size = 0x4, offset = 0x4, fixed_abs, tag = 'smem constant byte address 0x4 - core index']
  #allocation1 [shape = 'u32[72,128]{1,0:T(1,128)}', space=vmem, size = 0x9000, scoped, tag = 'internal scratch']
  #allocation2 [shape = 'f32[1,1]{1,0:T(1,128)S(1)}', space=vmem, size = 0x200, scoped, tag = 'scoped memory for fwd.1']
  %s0 = inlined_call_operand.<no memory space> [shape: f32[1,1], index: 0, kind: input, shape index: {}]
  %s1 = inlined_call_operand.hbm [shape: f32[2,8], index: 1, kind: output, shape index: {}]
  %s2 = sld [smem:[#allocation0]]
  $region14: #{fwd.1} parent=0
    _
  %s4 = ssub.s32 1, %s2
  %s5 = scalar_select 0, %s4, %s2
  %v6 = vstv %s0
  %7 = vst [vmem:[#allocation2] sm:$0x1] %v6
  $region1: #{fwd.1} parent=0
    #allocation3 [shape = 'u8[1024]{0}', space=vmem, size = 0x400, scoped, tag = 'output window, operand 0, single buffered']
    #allocation4 [shape = 's32[1]{0}', space=sflag, size = 0x4, scoped, tag = 'scoped memory for fwd.1']
    %8 = vsyncpa [#allocation4], 0
    // Predicated region
    $region2: #{fwd.1} parent=1 // pred_check
      _
    $region3: #{fwd.1} parent=1 // pred_check_branch
      %10 = sbr.rel (0) target = $region5
    $region4: #{fwd.1} parent=1 // pred_region
      _
    $region5: #{fwd.1} parent=1 // pred_fallthru
      _
    %v11 = vld [vmem:[#allocation2] sm:$0x1]
    %v12 = vxor.u32 %v11, 2147483648
    %v13 = vmul.f32 %v12, 1.442695
    %v14 = vpow.pop %v13
    %v15 = vadd.f32 %v14, 1.0
    %v16 = vrcp.pop %v15
    %v17 = vmul.f32 %v15, %v16
    %v18 = vsub.f32 1.0, %v17
    %v19 = vmul.f32 %v16, %v18
    %v20 = vadd.f32 %v16, %v19
    %vm21 = vweird.f32 %v15
    %vm22 = vweird.f32 %v16
    %vm23 = vmor %vm21, %vm22
    %v24 = vsel %vm23, %v16, %v20
    %v25 = vand.u32 2147483647, %v15
    %vm26 = vcmp.eq.f32.partialorder %v25, 8.507059e+37
    %v27 = vand.u32 %v15, 2147483648
    %v28 = vor.u32 1.1754944e-38, %v27
    %v29 = vsel %vm26, %v28, %v24
    %v30 = vmul.f32 1.0, %v29
    %v31 = vmul.f32 %v30, 0.001
    %v32 = vadd.f32 %v31, 1.0
    %v33 = vmul.f32 %v32, 100.0
    %v34 = vlaneseq
    %v35 = vand.u32 %v34, 127
    %vm36 = vcmp.eq.s32.totalorder %v35, 0
    %v38 = vperm.slane %v33, 0
    %39 = vset.pattern.permute.xlu0 0
    %40 = vperm.xlu0 %39, %v38
    %v41 = vpop.permute.xlu0 %40
    %v43 = vsel %vm36, %v41, 0.0
    %vm44 = vcmask 58368
    %45 = vst.msk [vmem:[#allocation3] sm:$0x3] %vm44, %v43
    // Predicated region
    $region6: #{fwd.1} parent=1 // pred_check
      _
    $region7: #{fwd.1} parent=1 // pred_check_branch
      %47 = sbr.rel (0) target = $region9
    $region8: #{fwd.1} parent=1 // pred_region
      %49 = vsyncadd [#allocation4], 0
      %s51 = sshll.u32 [#allocation3], 4
      %s52 = int_to_ptr.vmem [resolvable:$true] %s51
      %s53 = sshll.u32 %s1, 4
      %s54 = int_to_ptr.hbm [resolvable:$true] %s53
      %56 = dma.vmem_to_hbm [thread:$0]  %s52, 32, %s54, [#allocation4]
    $region9: #{fwd.1} parent=1 // pred_fallthru
      _
    // Predicated region
    $region10: #{fwd.1} parent=1 // pred_check
      _
    $region11: #{fwd.1} parent=1 // pred_check_branch
      %58 = sbr.rel (0) target = $region13
    $region12: #{fwd.1} parent=1 // pred_region
      %60 = dma.done [#allocation4], 32
    $region13: #{fwd.1} parent=1 // pred_fallthru
      _
    %61 = vsyncpa [#allocation4], 1

</llo_original>
